<compile_context>
chip_gen: v6e
topology: v6e:2x2x1
jax: 0.10.0
libtpu: 0.0.40
codegen_flags: <defaults>
</compile_context>

<pallas_src>
import math
import functools

import jax
import jax.numpy as jnp
from jax.experimental import pallas as pl
from jax.experimental.pallas import tpu as pltpu


# ---------------------------------------------------------------------------
# Positional-encoding buffer (exactly mirrors the PyTorch double loop):
#   pe[pos, c] = sin(pos / 10000 ** (2*c / d_model))  if c is even
#   pe[pos, c] = cos(pos / 10000 ** (2*c / d_model))  if c is odd
# (the odd column intentionally keeps the original's 2*(i+1)/d_model exponent)
# ---------------------------------------------------------------------------

def make_pe_table(d_model, max_seq_len=100):
    pos = jnp.arange(max_seq_len, dtype=jnp.float32)[:, None]      # (L, 1)
    col = jnp.arange(d_model, dtype=jnp.float32)[None, :]          # (1, D)
    ang = pos * jnp.power(10000.0, -2.0 * col / float(d_model))    # (L, D)
    even = (jnp.arange(d_model) % 2) == 0
    return jnp.where(even[None, :], jnp.sin(ang), jnp.cos(ang)).astype(jnp.float32)


# ---------------------------------------------------------------------------
# Fused kernel: out = x * sqrt(d_model) + pe
#   x_ref / o_ref : (B, tile_n)   lane-dense flattened slab
#   pe_ref        : (1, tile_n)   broadcast over batch sublanes
# ---------------------------------------------------------------------------

def _pos_enc_kernel(x_ref, pe_ref, o_ref, *, scale):
    o_ref[...] = x_ref[...] * scale + pe_ref[...]


_SINGLE_BLOCK_BYTES = 8 * 1024 * 1024   # comfortably inside scoped VMEM on v5e/v6e/v7x


def positional_encoder(x, pe, d_model, *, training=False):
    """x: (B, S, d_model) or (B, d_model, S); pe: (max_seq_len, d_model)."""
    if training:
        # TODO(synk): stochastic dropout (p=0.1) not implemented (inference-only kernel).
        raise NotImplementedError("training-mode dropout is not implemented")

    B = x.shape[0]
    transposed_input = (x.shape[1] == d_model)   # same dispatch rule as PyTorch
    if transposed_input:
        seq_len = x.shape[2]
        pe_tile = pe[:seq_len, :].T              # (D, S): pe in x's layout (trace-time)
    else:
        seq_len = x.shape[1]
        pe_tile = pe[:seq_len, :]                # (S, D)

    rows, cols = pe_tile.shape
    n = rows * cols
    x2d = x.reshape(B, n)                        # metadata-only, lane-dense last dim
    pe2d = pe_tile.reshape(1, n)

    kernel = functools.partial(_pos_enc_kernel, scale=math.sqrt(d_model))
    out_shape = jax.ShapeDtypeStruct((B, n), jnp.float32)

    total_bytes = 4 * (2 * B * n + n)            # x + out + pe resident in VMEM
    if total_bytes <= _SINGLE_BLOCK_BYTES:
        # Single block, no grid: zero per-step pipeline overhead, one DMA per array.
        out2d = pl.pallas_call(kernel, out_shape=out_shape)(x2d, pe2d)
    else:
        # Production-size fallback: tile the flattened lane axis in multiples of
        # 128; biggest tile that keeps double-buffered x/out (+ pe) in VMEM.
        budget_f32 = _SINGLE_BLOCK_BYTES // 4
        tn = max(128, (budget_f32 // (4 * B + 2)) // 128 * 128)
        tn = min(tn, pl.cdiv(n, 128) * 128)
        out2d = pl.pallas_call(
            kernel,
            out_shape=out_shape,
            grid=(pl.cdiv(n, tn),),
            in_specs=[
                pl.BlockSpec((B, tn), lambda j: (0, j)),
                pl.BlockSpec((1, tn), lambda j: (0, j)),
            ],
            out_specs=pl.BlockSpec((B, tn), lambda j: (0, j)),
            compiler_params=pltpu.CompilerParams(
                dimension_semantics=("parallel",)),
        )(x2d, pe2d)

    return out2d.reshape(x.shape)


# ---------------------------------------------------------------------------
# Pure-JAX reference (mirrors the PyTorch forward, eval mode)
# ---------------------------------------------------------------------------

def reference_pos_enc(x, pe, d_model):
    transposed_input = (x.shape[1] == d_model)
    if transposed_input:
        x = jnp.transpose(x, (0, 2, 1))
    seq_len = x.shape[1]
    y = x * math.sqrt(d_model) + pe[None, :seq_len, :]
    if transposed_input:
        y = jnp.transpose(y, (0, 2, 1))
    return y


# ---------------------------------------------------------------------------
# main
# ---------------------------------------------------------------------------

if __name__ == "__main__":
    d_model = 32
    max_seq_len = 100
    B, S = 2, 8

    key = jax.random.PRNGKey(0)
    k1, k2 = jax.random.split(key, 2)

    pe = make_pe_table(d_model, max_seq_len)

    # Case 1: (B, S, d_model) input (seq-major, not transposed).
    x_seq = jax.random.normal(k1, (B, S, d_model), jnp.float32)
    out_seq = jax.block_until_ready(positional_encoder(x_seq, pe, d_model))
    ref_seq = reference_pos_enc(x_seq, pe, d_model)
    assert out_seq.shape == (B, S, d_model), out_seq.shape
    assert jnp.allclose(out_seq, ref_seq, atol=1e-5, rtol=1e-5), "seq-major mismatch"

    # Case 2: (B, d_model, S) input (channels-first, the "transposed" branch).
    x_cf = jax.random.normal(k2, (B, d_model, S), jnp.float32)
    out_cf = jax.block_until_ready(positional_encoder(x_cf, pe, d_model))
    ref_cf = reference_pos_enc(x_cf, pe, d_model)
    assert out_cf.shape == (B, d_model, S), out_cf.shape
    assert jnp.allclose(out_cf, ref_cf, atol=1e-5, rtol=1e-5), "channels-first mismatch"

    print("KERNEL_OK")
</pallas_src>

<mosaic_0001>
module attributes {stable_mosaic.version = 11 : i64} {
  func.func @_pos_enc_kernel(%arg0: memref<2x256xf32, #tpu.memory_space<vmem>>, %arg1: memref<1x256xf32, #tpu.memory_space<vmem>>, %arg2: memref<2x256xf32, #tpu.memory_space<vmem>>) attributes {dimension_semantics = [], scalar_prefetch = 0 : i64, scratch_operands = 0 : i64, tpu.core_type = #tpu.core_type<tc>} {
    %c0 = arith.constant 0 : index
    %c0_0 = arith.constant 0 : index
    %0 = vector.load %arg0[%c0, %c0_0] : memref<2x256xf32, #tpu.memory_space<vmem>>, vector<2x256xf32>
    %cst = arith.constant 5.65685415 : f32
    %1 = vector.broadcast %cst : f32 to vector<2x256xf32>
    %2 = arith.mulf %0, %1 : vector<2x256xf32>
    %c0_1 = arith.constant 0 : index
    %c0_2 = arith.constant 0 : index
    %3 = vector.load %arg1[%c0_1, %c0_2] : memref<1x256xf32, #tpu.memory_space<vmem>>, vector<1x256xf32>
    %4 = vector.broadcast %3 : vector<1x256xf32> to vector<2x256xf32>
    %5 = arith.addf %2, %4 : vector<2x256xf32>
    %c0_3 = arith.constant 0 : index
    %c0_4 = arith.constant 0 : index
    %6 = vector.load %arg2[%c0_3, %c0_4] : memref<2x256xf32, #tpu.memory_space<vmem>>, vector<2x256xf32>
    tpu.vector_store %arg2[%c0_3, %c0_4], %5 {strides = array<i32>} : memref<2x256xf32, #tpu.memory_space<vmem>>, vector<2x256xf32>,
    return
  }
}

</mosaic_0001>

<llo_original>
// kernel: tpu_custom_call.1
$region0: #{tpu_custom_call.1}
  #allocation0 [shape = 'u32[]', space=smem, size = 0x4, offset = 0x4, fixed_abs, tag = 'smem constant byte address 0x4 - core index']
  #allocation1 [shape = 'u32[144,128]{1,0:T(1,128)}', space=vmem, size = 0x12000, scoped, tag = 'internal scratch']
  %s0 = inlined_call_operand.hbm [shape: f32[2,256], index: 0, kind: input, shape index: {}]
  %s1 = inlined_call_operand.hbm [shape: f32[1,256], index: 1, kind: input, shape index: {}]
  %s2 = inlined_call_operand.hbm [shape: f32[2,256], index: 2, kind: output, shape index: {}]
  %s3 = sld [smem:[#allocation0]]
  $region26: #{tpu_custom_call.1} parent=0
    _
  %s5 = ssub.s32 1, %s3
  %s6 = scalar_select 0, %s5, %s3
  $region1: #{tpu_custom_call.1} parent=0
    #allocation2 [shape = 'u8[2048]{0}', space=vmem, size = 0x800, scoped, tag = 'input window, operand 0, single buffered']
    #allocation3 [shape = 's32[1]{0}', space=sflag, size = 0x4, scoped, tag = 'scoped memory for tpu_custom_call.1']
    #allocation4 [shape = 's32[1]{0}', space=sflag, size = 0x4, scoped, tag = 'scoped memory for tpu_custom_call.1']
    #allocation5 [shape = 'u8[1024]{0}', space=vmem, size = 0x400, scoped, tag = 'input window, operand 1, single buffered']
    #allocation6 [shape = 's32[1]{0}', space=sflag, size = 0x4, scoped, tag = 'scoped memory for tpu_custom_call.1']
    #allocation7 [shape = 'u8[2048]{0}', space=vmem, size = 0x800, scoped, tag = 'output window, operand 0, single buffered']
    %7 = vsyncpa [#allocation3], 0
    %8 = vsyncpa [#allocation6], 0
    %9 = vsyncpa [#allocation4], 0
    // Predicated region
    $region2: #{tpu_custom_call.1} parent=1 // pred_check
      _
    $region3: #{tpu_custom_call.1} parent=1 // pred_check_branch
      %11 = sbr.rel (0) target = $region5
    $region4: #{tpu_custom_call.1} parent=1 // pred_region
      %s13 = ssub.s32 64, 64
      %14 = vsyncadd [#allocation3], %s13
      %s16 = sshll.u32 [#allocation2], 4
      %s17 = int_to_ptr.vmem [resolvable:$true] %s16
      %19 = dma.hbm_to_vmem [thread:$0]  %s0, 64, %s17, [#allocation3]
    $region5: #{tpu_custom_call.1} parent=1 // pred_fallthru
      _
    // Predicated region
    $region6: #{tpu_custom_call.1} parent=1 // pred_check
      _
    $region7: #{tpu_custom_call.1} parent=1 // pred_check_branch
      %21 = sbr.rel (0) target = $region9
    $region8: #{tpu_custom_call.1} parent=1 // pred_region
      %s23 = ssub.s32 32, 32
      %24 = vsyncadd [#allocation6], %s23
      %s26 = sshll.u32 [#allocation5], 4
      %s27 = int_to_ptr.vmem [resolvable:$true] %s26
      %29 = dma.hbm_to_vmem [thread:$0]  %s1, 32, %s27, [#allocation6]
    $region9: #{tpu_custom_call.1} parent=1 // pred_fallthru
      _
    // Predicated region
    $region10: #{tpu_custom_call.1} parent=1 // pred_check
      _
    $region11: #{tpu_custom_call.1} parent=1 // pred_check_branch
      %31 = sbr.rel (0) target = $region13
    $region12: #{tpu_custom_call.1} parent=1 // pred_region
      %32 = dma.done [#allocation3], 64
    $region13: #{tpu_custom_call.1} parent=1 // pred_fallthru
      _
    // Predicated region
    $region14: #{tpu_custom_call.1} parent=1 // pred_check
      _
    $region15: #{tpu_custom_call.1} parent=1 // pred_check_branch
      %34 = sbr.rel (0) target = $region17
    $region16: #{tpu_custom_call.1} parent=1 // pred_region
      %35 = dma.done [#allocation6], 32
    $region17: #{tpu_custom_call.1} parent=1 // pred_fallthru
      _
    %v36 = vld [vmem:[#allocation2] sm:$0xf]
    %v37 = vmul.f32 %v36, 5.656854
    %v38 = vld [vmem:[#allocation5] sm:$0x3]
    %v40 = vlaneseq
    %v41 = vshrl.u32 %v40, 7
    %v42 = vsub.s32 0, %v41
    %v43 = vrot.slane %v38, %v42
    %v44 = vlaneseq
    %v45 = vshrl.u32 %v44, 7
    %v46 = vsub.s32 1, %v45
    %v47 = vrot.slane %v38, %v46
    %v48 = vcombine.low %v43, %v47
    %v50 = vunpack.c.l.s4 1983009808
    %v51 = vunpack.c.0.s8 %v50
    %v52 = vlaneseq
    %v53 = vshrl.u32 %v52, 7
    %v54 = vsub.s32 %v51, %v53
    %v55 = vrot.slane %v48, %v54
    %v57 = vadd.f32 %v37, %v55
    %58 = vst [vmem:[#allocation7] sm:$0xf] %v57
    // Predicated region
    $region18: #{tpu_custom_call.1} parent=1 // pred_check
      _
    $region19: #{tpu_custom_call.1} parent=1 // pred_check_branch
      %60 = sbr.rel (0) target = $region21
    $region20: #{tpu_custom_call.1} parent=1 // pred_region
      %s62 = ssub.s32 64, 64
      %63 = vsyncadd [#allocation4], %s62
      %s65 = sshll.u32 [#allocation7], 4
      %s66 = int_to_ptr.vmem [resolvable:$true] %s65
      %68 = dma.vmem_to_hbm [thread:$0]  %s66, 64, %s2, [#allocation4]
    $region21: #{tpu_custom_call.1} parent=1 // pred_fallthru
      _
    // Predicated region
    $region22: #{tpu_custom_call.1} parent=1 // pred_check
      _
    $region23: #{tpu_custom_call.1} parent=1 // pred_check_branch
      %70 = sbr.rel (0) target = $region25
    $region24: #{tpu_custom_call.1} parent=1 // pred_region
      %71 = dma.done [#allocation4], 64
    $region25: #{tpu_custom_call.1} parent=1 // pred_fallthru
      _
    %72 = vsyncpa [#allocation3], 1
    %73 = vsyncpa [#allocation6], 1
    %74 = vsyncpa [#allocation4], 1

</llo_original>
